<compile_context>
chip_gen: v7x
topology: tpu7x:2x2x1
jax: 0.10.0
libtpu: 0.0.40
codegen_flags: <defaults>
</compile_context>

<pallas_src>
import jax
import jax.numpy as jnp
from jax.experimental import pallas as pl
from jax.experimental.pallas import tpu as pltpu


def _round_up(x, m):
    return -(-x // m) * m


def _compute_padding(kernel_size, dilation, causal):
    """Reproduces DilatConv2d.__init__ padding logic. Returns (pt0, pt1, pf0, pf1)."""
    k_t, k_f = kernel_size
    d_t, d_f = dilation
    k_t_eff = k_t + (k_t - 1) * (d_t - 1)
    k_f_eff = k_f + (k_f - 1) * (d_f - 1)
    pad_f0 = (k_f_eff - 1) // 2
    pad_f1 = (k_f_eff - 1) - pad_f0
    if k_t_eff > 1:
        if causal:
            pad_t0, pad_t1 = k_t_eff - 1, 0
        else:
            pad_t0, pad_t1 = k_t_eff - 2, 1
    else:
        # padding='same' branch: time kernel is 1 -> no time pad; freq pad as above.
        pad_t0, pad_t1 = 0, 0
    return pad_t0, pad_t1, pad_f0, pad_f1


# --------------------------------------------------------------------------
# One-time (module-init) parameter preparation
# --------------------------------------------------------------------------
def prepare_dilat_conv2d(weight_oihw, bias, *, F, stride=(1, 1), dilation=(1, 1),
                         causal=True, compute_dtype=jnp.bfloat16):
    """Build the banded-weight and bias slabs once per layer (hoisted out of
    the per-call path)."""
    Cout, Cin, k_t, k_f = weight_oihw.shape
    s_t, s_f = stride
    d_t, d_f = dilation
    k_t_eff = k_t + (k_t - 1) * (d_t - 1)
    k_f_eff = k_f + (k_f - 1) * (d_f - 1)
    pad_t0, pad_t1, pad_f0, pad_f1 = _compute_padding((k_t, k_f), dilation, causal)
    F_out = (F + pad_f0 + pad_f1 - k_f_eff) // s_f + 1

    K = F * Cin
    KT = k_t * K                      # im2col contraction length (freq pad folded away)
    NOUT = F_out * Cout
    KT_pad = _round_up(KT, 128)       # lane-dense contraction dim
    NOUT_pad = _round_up(NOUT, 128)   # lane-dense output dim (unmasked vst)

    # Block-banded weight with the frequency zero-padding folded in:
    #   W[kt*K + fin*Cin + ci, f*Cout + co] = w[co, ci, kt, kf]
    #     iff fin == f*s_f + kf*d_f - pad_f0 and 0 <= fin < F.
    # TODO(synk): for large F / Cin this band is O(F^2*Cin*Cout) in bytes and
    # MXU FLOPs; switch to a per-(kt,kf) dense (Cin,Cout) matmul path or an
    # F_out-tiled band (DMA only the touched K window) for those layers.
    w_t = jnp.transpose(weight_oihw, (2, 3, 1, 0)).astype(jnp.float32)  # (k_t,k_f,Cin,Cout)
    fin = jnp.arange(F)[:, None]                                        # (F, 1)
    f = jnp.arange(F_out)[None, :]                                      # (1, F_out)
    band = jnp.zeros((k_t, F, Cin, F_out, Cout), jnp.float32)
    for kt in range(k_t):
        blk = jnp.zeros((F, Cin, F_out, Cout), jnp.float32)
        for kf in range(k_f):
            sel = (fin == f * s_f + kf * d_f - pad_f0).astype(jnp.float32)  # (F, F_out)
            blk = blk + sel[:, None, :, None] * w_t[kt, kf][None, :, None, :]
        band = band.at[kt].set(blk)
    w_slab = band.reshape(KT, NOUT)
    w_slab = jnp.pad(w_slab, ((0, KT_pad - KT), (0, NOUT_pad - NOUT)))
    w_slab = w_slab.astype(compute_dtype)

    # Bias slab: column index f*Cout + co -> bias[co]; padded columns are zero.
    b_slab = jnp.tile(bias.reshape(1, Cout).astype(jnp.float32), (1, F_out))
    b_slab = jnp.pad(b_slab, ((0, 0), (0, NOUT_pad - NOUT)))

    meta = dict(Cin=Cin, Cout=Cout, k_t=k_t, d_t=d_t, s_t=s_t,
                k_t_eff=k_t_eff, pad_t0=pad_t0, pad_t1=pad_t1,
                F=F, F_out=F_out, K=K, KT=KT, KT_pad=KT_pad,
                NOUT=NOUT, NOUT_pad=NOUT_pad, compute_dtype=compute_dtype)
    return w_slab, b_slab, meta


# --------------------------------------------------------------------------
# Pallas kernel: one lane-dense matmul tile per grid step
# --------------------------------------------------------------------------
def _conv_matmul_kernel(x_ref, w_ref, b_ref, o_ref):
    # x_ref: (TM, KT_pad)        im2col activation rows (compute dtype)
    # w_ref: (KT_pad, NOUT_pad)  banded weight (compute dtype), grid-invariant
    # b_ref: (1, NOUT_pad)       f32 bias row, grid-invariant
    # o_ref: (TM, NOUT_pad)      lane-dense output tile
    acc = jnp.dot(x_ref[...], w_ref[...], preferred_element_type=jnp.float32)
    o_ref[...] = (acc + b_ref[...]).astype(o_ref.dtype)


def dilat_conv2d_apply(w_slab, b_slab, meta, x_nchw, *, out_dtype=None):
    """Forward pass given prepared params. Input/output in NCHW (PyTorch)."""
    N, Cin, T, F = x_nchw.shape
    assert Cin == meta["Cin"] and F == meta["F"]
    k_t, d_t, s_t = meta["k_t"], meta["d_t"], meta["s_t"]
    k_t_eff, pad_t0, pad_t1 = meta["k_t_eff"], meta["pad_t0"], meta["pad_t1"]
    KT, KT_pad = meta["KT"], meta["KT_pad"]
    F_out, NOUT, NOUT_pad = meta["F_out"], meta["NOUT"], meta["NOUT_pad"]
    Cout = meta["Cout"]
    cdt = meta["compute_dtype"]
    out_dtype = out_dtype or x_nchw.dtype

    # ---- wrapper glue (plain XLA): NCHW -> time-padded NHWC -> im2col slab --
    # TODO(synk): chain DPCRN layers on the lane-dense (N*T, F*C) slab directly
    # to avoid the NCHW<->NHWC relayouts on every layer.
    x = jnp.transpose(x_nchw, (0, 2, 3, 1))                      # (N, T, F, Cin)
    x = jnp.pad(x, ((0, 0), (pad_t0, pad_t1), (0, 0), (0, 0)))   # time pad only
    T_pad = T + pad_t0 + pad_t1
    T_out = (T_pad - k_t_eff) // s_t + 1

    # Pre-gather the k_t time taps (contiguous per-tap slabs); time stride and
    # dilation are absorbed here, so in-kernel loads are plain contiguous rows.
    taps = [x[:, kt * d_t: kt * d_t + (T_out - 1) * s_t + 1: s_t]
            for kt in range(k_t)]
    x_taps = jnp.stack(taps, axis=2)                             # (N, T_out, k_t, F, Cin)
    x_slab = x_taps.reshape(N * T_out, KT).astype(cdt)

    M = N * T_out
    # Row tiling: ~256 rows per tile keeps the MXU busy on v6e/v7x and gives
    # megacore-shardable grid steps; tiny problems collapse to a single tile.
    TM = 256 if M >= 256 else _round_up(M, 8)
    M_pad = _round_up(M, TM)
    if M_pad != M or KT_pad != KT:
        x_slab = jnp.pad(x_slab, ((0, M_pad - M), (0, KT_pad - KT)))

    out2d = pl.pallas_call(
        _conv_matmul_kernel,
        out_shape=jax.ShapeDtypeStruct((M_pad, NOUT_pad), out_dtype),
        grid=(M_pad // TM,),
        in_specs=[
            pl.BlockSpec((TM, KT_pad), lambda i: (i, 0)),
            # Weight / bias blocks are grid-invariant (constant index_map), so
            # they are only fetched once.  TODO(synk): single-buffer them
            # (pipeline_mode=pl.Buffered(1)) for large bands to halve their
            # VMEM footprint on v7x.
            pl.BlockSpec((KT_pad, NOUT_pad), lambda i: (0, 0)),
            pl.BlockSpec((1, NOUT_pad), lambda i: (0, 0)),
        ],
        out_specs=pl.BlockSpec((TM, NOUT_pad), lambda i: (i, 0)),
        compiler_params=pltpu.CompilerParams(
            dimension_semantics=("parallel",)),
    )(x_slab, w_slab, b_slab)

    out2d = out2d[:M, :NOUT]
    out_nhwc = out2d.reshape(N, T_out, F_out, Cout)
    return jnp.transpose(out_nhwc, (0, 3, 1, 2))                 # NCHW


def dilat_conv2d(x_nchw, weight_oihw, bias, *, stride=(1, 1), dilation=(1, 1),
                 causal=True, compute_dtype=jnp.bfloat16):
    """Convenience wrapper: prepare + apply (use prepare_* once for streaming)."""
    # TODO(synk): groups > 1 (grouped conv) not implemented; module default is groups=1.
    assert weight_oihw.shape[1] == x_nchw.shape[1], "only groups=1 supported"
    w_slab, b_slab, meta = prepare_dilat_conv2d(
        weight_oihw, bias, F=x_nchw.shape[3], stride=stride, dilation=dilation,
        causal=causal, compute_dtype=compute_dtype)
    return dilat_conv2d_apply(w_slab, b_slab, meta, x_nchw)


# --------------------------------------------------------------------------
# Pure-JAX reference (same semantics as nn.ConstantPad2d + nn.Conv2d)
# --------------------------------------------------------------------------
def _reference(x, weight, bias, stride, dilation, causal):
    k_t, k_f = weight.shape[2], weight.shape[3]
    pt0, pt1, pf0, pf1 = _compute_padding((k_t, k_f), dilation, causal)
    return jax.lax.conv_general_dilated(
        x, weight,
        window_strides=stride,
        padding=((pt0, pt1), (pf0, pf1)),
        rhs_dilation=dilation,
        dimension_numbers=("NCHW", "OIHW", "NCHW"),
    ) + bias[None, :, None, None]


if __name__ == "__main__":
    key = jax.random.PRNGKey(0)
    k1, k2, k3 = jax.random.split(key, 3)

    N, Cin, T, F = 2, 4, 16, 16
    Cout = 8

    x = jax.random.normal(k1, (N, Cin, T, F), jnp.float32)
    weight = 0.1 * jax.random.normal(k2, (Cout, Cin, 2, 3), jnp.float32)
    bias = 0.1 * jax.random.normal(k3, (Cout,), jnp.float32)

    configs = [
        # (stride, dilation, causal)
        ((1, 1), (2, 2), True),    # primary DPCRN causal dilated conv
        ((1, 2), (1, 1), False),   # non-causal asymmetric time pad + freq stride
        ((2, 1), (1, 1), True),    # time stride > 1 (exercises the tap gather path)
    ]

    for stride, dilation, causal in configs:
        ref = _reference(x, weight, bias, stride, dilation, causal)

        # Exact-semantics check: f32 operands, tight tolerance.
        out_f32 = dilat_conv2d(x, weight, bias, stride=stride, dilation=dilation,
                               causal=causal, compute_dtype=jnp.float32)
        out_f32 = jax.block_until_ready(out_f32)
        assert out_f32.shape == ref.shape, (out_f32.shape, ref.shape)
        assert jnp.allclose(out_f32, ref, atol=1e-4, rtol=1e-4), \
            (stride, dilation, causal, float(jnp.max(jnp.abs(out_f32 - ref))))

        # Fast path: bf16 operands on the MXU, f32 accumulation.
        out_bf16 = dilat_conv2d(x, weight, bias, stride=stride, dilation=dilation,
                                causal=causal, compute_dtype=jnp.bfloat16)
        out_bf16 = jax.block_until_ready(out_bf16)
        assert out_bf16.shape == ref.shape, (out_bf16.shape, ref.shape)
        assert jnp.allclose(out_bf16, ref, atol=2.5e-2, rtol=2.5e-2), \
            (stride, dilation, causal, float(jnp.max(jnp.abs(out_bf16 - ref))))

    print("KERNEL_OK")
</pallas_src>

<mosaic_0001>
module attributes {stable_mosaic.version = 11 : i64} {
  func.func @_conv_matmul_kernel(%arg0: i32, %arg1: memref<32x128xf32, #tpu.memory_space<vmem>>, %arg2: memref<128x128xf32, #tpu.memory_space<vmem>>, %arg3: memref<1x128xf32, #tpu.memory_space<vmem>>, %arg4: memref<32x128xf32, #tpu.memory_space<vmem>>) attributes {dimension_semantics = [#tpu.dimension_semantics<parallel>], iteration_bounds = array<i64: 1>, scalar_prefetch = 0 : i64, scratch_operands = 0 : i64, tpu.core_type = #tpu.core_type<tc>, window_params = [{transform_indices = @transform_0, window_bounds = array<i64: 32, 128>}, {pipeline_mode = #tpu.pipeline_mode<synchronous>, transform_indices = @transform_1, window_bounds = array<i64: 128, 128>}, {pipeline_mode = #tpu.pipeline_mode<synchronous>, transform_indices = @transform_2, window_bounds = array<i64: 1, 128>}, {transform_indices = @transform_3, window_bounds = array<i64: 32, 128>}]} {
    %c0 = arith.constant 0 : index
    %c0_0 = arith.constant 0 : index
    %0 = vector.load %arg1[%c0, %c0_0] : memref<32x128xf32, #tpu.memory_space<vmem>>, vector<32x128xf32>
    %c0_1 = arith.constant 0 : index
    %c0_2 = arith.constant 0 : index
    %1 = vector.load %arg2[%c0_1, %c0_2] : memref<128x128xf32, #tpu.memory_space<vmem>>, vector<128x128xf32>
    %cst = arith.constant dense<0.000000e+00> : vector<32x128xf32>
    %2 = tpu.matmul %0, %1, %cst {dimension_numbers = #tpu.dot_dimension_numbers<[1], [0], [0], [1], [0, 0, 1, 1], [], []>} : vector<32x128xf32>, vector<128x128xf32>, vector<32x128xf32> -> vector<32x128xf32>
    %c0_3 = arith.constant 0 : index
    %c0_4 = arith.constant 0 : index
    %3 = vector.load %arg3[%c0_3, %c0_4] : memref<1x128xf32, #tpu.memory_space<vmem>>, vector<1x128xf32>
    %4 = vector.broadcast %3 : vector<1x128xf32> to vector<32x128xf32>
    %5 = arith.addf %2, %4 : vector<32x128xf32>
    %c0_5 = arith.constant 0 : index
    %c0_6 = arith.constant 0 : index
    %6 = vector.load %arg4[%c0_5, %c0_6] : memref<32x128xf32, #tpu.memory_space<vmem>>, vector<32x128xf32>
    tpu.vector_store %arg4[%c0_5, %c0_6], %5 {strides = array<i32>} : memref<32x128xf32, #tpu.memory_space<vmem>>, vector<32x128xf32>,
    return
  }
  func.func @transform_0(%arg0: i32) -> (i32, i32) {
    %c0_i32 = arith.constant 0 : i32
    %c0_i32_0 = arith.constant 0 : i32
    return %arg0, %c0_i32 : i32, i32
  }
  func.func @transform_1(%arg0: i32) -> (i32, i32) {
    %c0_i32 = arith.constant 0 : i32
    %c0_i32_0 = arith.constant 0 : i32
    %c0_i32_1 = arith.constant 0 : i32
    return %c0_i32, %c0_i32_0 : i32, i32
  }
  func.func @transform_2(%arg0: i32) -> (i32, i32) {
    %c0_i32 = arith.constant 0 : i32
    %c0_i32_0 = arith.constant 0 : i32
    %c0_i32_1 = arith.constant 0 : i32
    return %c0_i32, %c0_i32_0 : i32, i32
  }
  func.func @transform_3(%arg0: i32) -> (i32, i32) {
    %c0_i32 = arith.constant 0 : i32
    %c0_i32_0 = arith.constant 0 : i32
    return %arg0, %c0_i32 : i32, i32
  }
}

</mosaic_0001>

<llo_original>
// kernel: tpu_custom_call.1
$region0: #{tpu_custom_call.1}
  #allocation0 [shape = 'u32[]', space=smem, size = 0x4, offset = 0x4, fixed_abs, tag = 'smem constant byte address 0x4 - core index']
  #allocation1 [shape = 'u32[144,128]{1,0:T(1,128)}', space=vmem, size = 0x12000, scoped, tag = 'internal scratch']
  %s0 = inlined_call_operand.hbm [shape: f32[32,128], index: 0, kind: input, shape index: {}]
  %s1 = inlined_call_operand.hbm [shape: f32[128,128], index: 1, kind: input, shape index: {}]
  %s2 = inlined_call_operand.vmem [shape: f32[1,128], index: 2, kind: input, shape index: {}]
  %s3 = inlined_call_operand.hbm [shape: f32[32,128], index: 3, kind: output, shape index: {}]
  %s4 = sld [smem:[#allocation0]]
  $region30: #{tpu_custom_call.1} parent=0
    _
  %s6 = ssub.s32 1, %s4
  %s7 = scalar_select 0, %s6, %s4
  $region1: #{tpu_custom_call.1} parent=0
    #allocation2 [shape = 'u8[16384]{0}', space=vmem, size = 0x4000, scoped, tag = 'input window, operand 0, single buffered']
    #allocation3 [shape = 's32[1]{0}', space=sflag, size = 0x4, scoped, tag = 'scoped memory for tpu_custom_call.1']
    #allocation4 [shape = 's32[1]{0}', space=sflag, size = 0x4, scoped, tag = 'scoped memory for tpu_custom_call.1']
    #allocation5 [shape = 'u8[65536]{0}', space=vmem, size = 0x10000, scoped, tag = 'input window, operand 1, single buffered']
    #allocation6 [shape = 's32[1]{0}', space=sflag, size = 0x4, scoped, tag = 'scoped memory for tpu_custom_call.1']
    #allocation7 [shape = 'u8[16384]{0}', space=vmem, size = 0x4000, scoped, tag = 'output window, operand 0, single buffered']
    %8 = vsyncpa [#allocation3], 0
    %9 = vsyncpa [#allocation6], 0
    %10 = vsyncpa [#allocation4], 0
    // Predicated region
    $region2: #{tpu_custom_call.1} parent=1 // pred_check
      _
    $region3: #{tpu_custom_call.1} parent=1 // pred_check_branch
      %12 = sbr.rel (0) target = $region5
    $region4: #{tpu_custom_call.1} parent=1 // pred_region
      %s14 = ssub.s32 512, 512
      %15 = vsyncadd [#allocation3], %s14
      %s16 = sshll.u32 [#allocation2], 4
      %s17 = int_to_ptr.vmem [resolvable:$true] %s16
      %22 = dma.hbm_to_vmem [thread:$0]  %s0, 512, %s17, [#allocation3], 128, 128, 8
    $region5: #{tpu_custom_call.1} parent=1 // pred_fallthru
      _
    // Predicated region
    $region6: #{tpu_custom_call.1} parent=1 // pred_check
      _
    $region7: #{tpu_custom_call.1} parent=1 // pred_check_branch
      %24 = sbr.rel (0) target = $region9
    $region8: #{tpu_custom_call.1} parent=1 // pred_region
      %s26 = ssub.s32 2048, 2048
      %27 = vsyncadd [#allocation6], %s26
      %s28 = sshll.u32 [#allocation5], 4
      %s29 = int_to_ptr.vmem [resolvable:$true] %s28
      %34 = dma.hbm_to_vmem [thread:$0]  %s1, 2048, %s29, [#allocation6], 128, 128, 8
    $region9: #{tpu_custom_call.1} parent=1 // pred_fallthru
      _
    // Predicated region
    $region10: #{tpu_custom_call.1} parent=1 // pred_check
      _
    $region11: #{tpu_custom_call.1} parent=1 // pred_check_branch
      %36 = sbr.rel (0) target = $region13
    $region12: #{tpu_custom_call.1} parent=1 // pred_region
      _
    $region13: #{tpu_custom_call.1} parent=1 // pred_fallthru
      _
    // Predicated region
    $region14: #{tpu_custom_call.1} parent=1 // pred_check
      _
    $region15: #{tpu_custom_call.1} parent=1 // pred_check_branch
      %38 = sbr.rel (0) target = $region17
    $region16: #{tpu_custom_call.1} parent=1 // pred_region
      %39 = dma.done [#allocation3], 512
    $region17: #{tpu_custom_call.1} parent=1 // pred_fallthru
      _
    // Predicated region
    $region18: #{tpu_custom_call.1} parent=1 // pred_check
      _
    $region19: #{tpu_custom_call.1} parent=1 // pred_check_branch
      %41 = sbr.rel (0) target = $region21
    $region20: #{tpu_custom_call.1} parent=1 // pred_region
      %42 = dma.done [#allocation6], 2048
    $region21: #{tpu_custom_call.1} parent=1 // pred_fallthru
      _
    %v43 = vld [vmem:[#allocation2] sm:$0xff]
    %v44 = vld [vmem:[#allocation2 + $0x8] sm:$0xff]
    %v45 = vld [vmem:[#allocation2 + $0x10] sm:$0xff]
    %v46 = vld [vmem:[#allocation2 + $0x18] sm:$0xff]
    %v47 = vld [vmem:[#allocation5] sm:$0xff]
    %v48 = vld [vmem:[#allocation5 + $0x8] sm:$0xff]
    %v49 = vld [vmem:[#allocation5 + $0x10] sm:$0xff]
    %v50 = vld [vmem:[#allocation5 + $0x18] sm:$0xff]
    %v51 = vld [vmem:[#allocation5 + $0x20] sm:$0xff]
    %v52 = vld [vmem:[#allocation5 + $0x28] sm:$0xff]
    %v53 = vld [vmem:[#allocation5 + $0x30] sm:$0xff]
    %v54 = vld [vmem:[#allocation5 + $0x38] sm:$0xff]
    %v55 = vld [vmem:[#allocation5 + $0x40] sm:$0xff]
    %v56 = vld [vmem:[#allocation5 + $0x48] sm:$0xff]
    %v57 = vld [vmem:[#allocation5 + $0x50] sm:$0xff]
    %v58 = vld [vmem:[#allocation5 + $0x58] sm:$0xff]
    %v59 = vld [vmem:[#allocation5 + $0x60] sm:$0xff]
    %v60 = vld [vmem:[#allocation5 + $0x68] sm:$0xff]
    %v61 = vld [vmem:[#allocation5 + $0x70] sm:$0xff]
    %v62 = vld [vmem:[#allocation5 + $0x78] sm:$0xff]
    %v63 = vld [vmem:[%s2] sm:$0x1]
    %v65 = vlaneseq
    %v66 = vshrl.u32 %v65, 7
    %v67 = vsub.s32 0, %v66
    %v68 = vrot.slane %v63, %v67
    %70 = vmatprep.subr.mxu0 0.0
    %71 = vmatpush1.msra.mxu0 %v47
    %72 = vmatprep.subr.mxu0 0.0
    %73 = vmatpush1.msra.mxu0 %v48
    %74 = vmatprep.subr.mxu0 0.0
    %75 = vmatpush1.msra.mxu0 %v49
    %76 = vmatprep.subr.mxu0 0.0
    %77 = vmatpush1.msra.mxu0 %v50
    %78 = vmatprep.subr.mxu0 0.0
    %79 = vmatpush1.msra.mxu0 %v51
    %80 = vmatprep.subr.mxu0 0.0
    %81 = vmatpush1.msra.mxu0 %v52
    %82 = vmatprep.subr.mxu0 0.0
    %83 = vmatpush1.msra.mxu0 %v53
    %84 = vmatprep.subr.mxu0 0.0
    %85 = vmatpush1.msra.mxu0 %v54
    %86 = vmatprep.subr.mxu0 0.0
    %87 = vmatpush1.msra.mxu0 %v55
    %88 = vmatprep.subr.mxu0 0.0
    %89 = vmatpush1.msra.mxu0 %v56
    %90 = vmatprep.subr.mxu0 0.0
    %91 = vmatpush1.msra.mxu0 %v57
    %92 = vmatprep.subr.mxu0 0.0
    %93 = vmatpush1.msra.mxu0 %v58
    %94 = vmatprep.subr.mxu0 0.0
    %95 = vmatpush1.msra.mxu0 %v59
    %96 = vmatprep.subr.mxu0 0.0
    %97 = vmatpush1.msra.mxu0 %v60
    %98 = vmatprep.subr.mxu0 0.0
    %99 = vmatpush1.msra.mxu0 %v61
    %100 = vmatprep.subr.mxu0 0.0
    %101 = vmatpush1.msra.mxu0 %v62
    %102 = vmatprep.subr.mxu0 0.0
    %103 = vmatpush1.msra.mxu0 0.0
    %104 = vmatprep.subr.mxu0 0.0
    %105 = vmatpush1.msra.mxu0 0.0
    %106 = vmatprep.subr.mxu0 0.0
    %107 = vmatpush1.msra.mxu0 0.0
    %108 = vmatprep.subr.mxu0 0.0
    %109 = vmatpush1.msra.mxu0 0.0
    %110 = vmatprep.subr.mxu0 0.0
    %111 = vmatpush1.msra.mxu0 0.0
    %112 = vmatprep.subr.mxu0 0.0
    %113 = vmatpush1.msra.mxu0 0.0
    %114 = vmatprep.subr.mxu0 0.0
    %115 = vmatpush1.msra.mxu0 0.0
    %116 = vmatprep.subr.mxu0 0.0
    %117 = vmatpush1.msra.mxu0 0.0
    %118 = vmatprep.subr.mxu0 0.0
    %119 = vmatpush1.msra.mxu0 0.0
    %120 = vmatprep.subr.mxu0 0.0
    %121 = vmatpush1.msra.mxu0 0.0
    %122 = vmatprep.subr.mxu0 0.0
    %123 = vmatpush1.msra.mxu0 0.0
    %124 = vmatprep.subr.mxu0 0.0
    %125 = vmatpush1.msra.mxu0 0.0
    %126 = vmatprep.subr.mxu0 0.0
    %127 = vmatpush1.msra.mxu0 0.0
    %128 = vmatprep.subr.mxu0 0.0
    %129 = vmatpush1.msra.mxu0 0.0
    %130 = vmatprep.subr.mxu0 0.0
    %131 = vmatpush1.msra.mxu0 0.0
    %132 = vmatprep.subr.mxu0 0.0
    %133 = vmatpush1.msra.mxu0 0.0
    %134 = vmatprep.mubr.f32.mxu0 0.0
    %135 = vmatmul.mubr.f32.gmra.mrb[0].mxu0 %v43
    %v136 = vpop.f32.mrb[0].mxu0
    %v137 = vadd.f32 %v68, %v136
    %v138 = vpop.f32.mrb[0].mxu0
    %139 = vmatprep.mubr.f32.mxu0 0.0
    %140 = vmatmul.mubr.f32.gmra.mrb[0].mxu0 %v44
    %v141 = vpop.f32.mrb[0].mxu0
    %v142 = vadd.f32 %v68, %v141
    %v143 = vpop.f32.mrb[0].mxu0
    %144 = vmatprep.mubr.f32.mxu0 0.0
    %145 = vmatmul.mubr.f32.gmra.mrb[0].mxu0 %v45
    %v146 = vpop.f32.mrb[0].mxu0
    %v147 = vadd.f32 %v68, %v146
    %v148 = vpop.f32.mrb[0].mxu0
    %149 = vmatprep.mubr.f32.mxu0 0.0
    %150 = vmatmul.mubr.f32.gmra.mrb[0].mxu0 %v46
    %v151 = vpop.f32.mrb[0].mxu0
    %v152 = vadd.f32 %v68, %v151
    %v153 = vpop.f32.mrb[0].mxu0
    %154 = vdwg.mxu0
    %155 = vst [vmem:[#allocation7] sm:$0xff] %v137
    %156 = vst [vmem:[#allocation7 + $0x8] sm:$0xff] %v142
    %157 = vst [vmem:[#allocation7 + $0x10] sm:$0xff] %v147
    %158 = vst [vmem:[#allocation7 + $0x18] sm:$0xff] %v152
    // Predicated region
    $region22: #{tpu_custom_call.1} parent=1 // pred_check
      _
    $region23: #{tpu_custom_call.1} parent=1 // pred_check_branch
      %160 = sbr.rel (0) target = $region25
    $region24: #{tpu_custom_call.1} parent=1 // pred_region
      %s162 = ssub.s32 512, 512
      %163 = vsyncadd [#allocation4], %s162
      %s164 = sshll.u32 [#allocation7], 4
      %s165 = int_to_ptr.vmem [resolvable:$true] %s164
      %170 = dma.vmem_to_hbm [thread:$0]  %s165, 512, %s3, [#allocation4], 128, 128, 8
    $region25: #{tpu_custom_call.1} parent=1 // pred_fallthru
      _
    // Predicated region
    $region26: #{tpu_custom_call.1} parent=1 // pred_check
      _
    $region27: #{tpu_custom_call.1} parent=1 // pred_check_branch
      %172 = sbr.rel (0) target = $region29
    $region28: #{tpu_custom_call.1} parent=1 // pred_region
      %173 = dma.done [#allocation4], 512
    $region29: #{tpu_custom_call.1} parent=1 // pred_fallthru
      _
    %174 = vsyncpa [#allocation3], 1
    %175 = vsyncpa [#allocation6], 1
    %176 = vsyncpa [#allocation4], 1

</llo_original>
